<compile_context>
chip_gen: v6e
topology: v6e:2x2x1
jax: 0.10.0
libtpu: 0.0.40
codegen_flags: <defaults>
</compile_context>

<pallas_src>
import functools

import numpy as np
import jax
import jax.numpy as jnp
from jax import lax
from jax.experimental import pallas as pl
from jax.experimental.pallas import tpu as pltpu


def _round_up(v, m):
    return (v + m - 1) // m * m


def _fftcep_kernel(x_ref, a_ref, o_ref, *, N, real_H, n_iter, accel, n_out, inv_L):
    """One batch-tile of cepstral analysis.

    x_ref : (TB, Hp)   power spectrum tile (padded lanes hold 1.0 -> log == 0)
    a_ref : (Hp, Hp)   folded cosine matrix  A[k,n] = w_k * cos(2*pi*k*n/L)
                       (zero-padded beyond (H,H)); bf16, resident across steps
    o_ref : (TB, n_out) cepstrum, valid in the first N lanes
    """
    x = x_ref[...]
    logx = jnp.log(x)                                   # padded lanes -> 0

    a = a_ref[...]                                      # bf16, read once

    # e0 = irfft(log(x))[..., :H]  ==  logX @ A / L
    e0 = jnp.dot(logx.astype(jnp.bfloat16), a,
                 preferred_element_type=jnp.float32) * inv_L    # (TB, Hp) f32

    idx = lax.broadcasted_iota(jnp.int32, e0.shape, dimension=1)
    head = idx < N                                              # first N lanes

    v0 = jnp.where(head, e0, 0.0)        # v = e0[..., :N]   (kept full width)
    e_init = jnp.where(head, 0.0, e0)    # e = pad(e0[..., N:H], (N, 0))

    def one_iter(v, e):
        # f[:H] of the symmetric hfft spectrum; clamp preserves the symmetry,
        # so the folded ihfft (same matrix, scaled by 1/L) is exact.
        f = jnp.dot(e.astype(jnp.bfloat16), a,
                    preferred_element_type=jnp.float32)          # (TB, Hp)
        f = jnp.maximum(f, 0.0)                                  # masked_fill_
        e_new = jnp.dot(f.astype(jnp.bfloat16), a,
                        preferred_element_type=jnp.float32) * inv_L
        t = jnp.where(head, e_new * (1.0 + accel), 0.0)
        return v + t, e_new - t

    if n_iter <= 8:                       # small static trip-count: unroll
        v, e = v0, e_init
        for _ in range(n_iter):
            v, e = one_iter(v, e)
    else:                                 # large n_iter: tight steady-state loop
        v, e = lax.fori_loop(0, n_iter, lambda _, c: one_iter(*c), (v0, e_init))

    # Slice to the lane-dense output width BEFORE scaling (feedback item).
    v_out = v[:, :n_out]
    idx_o = idx[:, :n_out]
    if real_H == N:
        scale = jnp.where((idx_o == 0) | (idx_o == N - 1), 0.5, 1.0)
    else:
        scale = jnp.where(idx_o == 0, 0.5, 1.0)
    o_ref[...] = (v_out * scale).astype(o_ref.dtype)


def cepstral_analysis(x, cep_order, fft_length, n_iter=0, accel=0.0):
    """JAX/Pallas equivalent of diffsptk CepstralAnalysis.forward."""
    L = int(fft_length)
    assert L % 2 == 0, "fft_length must be even"
    H = L // 2 + 1
    N = cep_order + 1
    assert 0 <= cep_order <= L // 2
    assert 0 <= n_iter and 0.0 <= accel
    assert x.shape[-1] == H, "dimension of spectrum must be fft_length//2 + 1"

    orig_shape = x.shape
    xf = x.reshape(-1, H).astype(jnp.float32)
    B = xf.shape[0]

    # ---- lane padding: multiples of 128 (full vregs, lane-dense stores) -----
    Hp = _round_up(H, 128)
    n_out = min(Hp, _round_up(N, 128))     # lane-dense output width (>= N)

    # ---- generation-aware hardware query -------------------------------------
    try:
        vmem_cap = int(pltpu.get_tpu_info().vmem_capacity_bytes)
    except Exception:                      # pragma: no cover - conservative fallback
        vmem_cap = 64 * 2**20              # assume v7x-sized VMEM if query fails
    try:
        kind = jax.devices()[0].device_kind.lower()
    except Exception:                      # pragma: no cover
        kind = ""
    num_tc = 2 if "v7" in kind else 1                       # 2 TCs only on v7x
    mxu_m = 128 if ("v5 lite" in kind or "v5e" in kind) else 256

    vmem_ceiling = int(vmem_cap * 0.85)    # never declare more than ~85% of VMEM
    tile_budget = vmem_cap // 2            # ~32 MiB on v7x, ~64 MiB on v5e/v6e

    # ---- batch tile selection (bounded by the VMEM tile budget) --------------
    # single bf16 (Hp,Hp) weight, double-buffered by the pipeline (DMA'd once)
    weight_bytes = 2 * 2 * Hp * Hp
    # per row: double-buffered f32 x/out tiles + live f32 temps (v,e,f,e_new)
    # + bf16 casts feeding the MXU, with a 1.25x safety factor for compiler
    # internal scratch (feedback: previous estimate under-counted).
    per_row_bytes = int((4 * (2 * Hp + 2 * n_out)
                         + 4 * 4 * Hp
                         + 2 * 2 * Hp) * 1.25)
    tb_cap = max(8, ((tile_budget - weight_bytes) // max(per_row_bytes, 1)) // 8 * 8)
    tb_cap = int(min(tb_cap, 1024))

    if B <= 8:
        TB = 8
    else:
        # Split across TensorCores only where TCs exist (v7x); on v5e/v6e the
        # grid is a serial loop, so one big tile maximizes MXU utilization.
        per_core = (B + num_tc - 1) // num_tc
        TB = int(min(tb_cap, _round_up(per_core, 8)))
        if TB >= mxu_m:                    # snap large tiles to MXU-friendly M
            TB = TB // mxu_m * mxu_m
        TB = max(TB, 8)
    Bp = _round_up(B, TB)

    vmem_need = weight_bytes + TB * per_row_bytes
    vmem_limit = int(min(vmem_ceiling, max(32 * 2**20, vmem_need * 3 // 2)))
    vmem_limit = max(vmem_limit, min(vmem_ceiling, vmem_need))

    # pad rows and lanes with 1.0 (log -> 0, so padding stays exactly 0)
    xf = jnp.pad(xf, ((0, Bp - B), (0, Hp - H)), constant_values=1.0)

    # ---- single folded cosine matrix A = w * C  (norm="backward") ------------
    #   irfft(X)[:H] = X @ A / L ;  hfft(e)[:H] = e @ A ;  ihfft(f) = f @ A / L
    k = np.arange(H)
    C = np.cos(2.0 * np.pi * np.outer(k, k) / L)                 # (H, H)
    w = np.where((k == 0) | (k == H - 1), 1.0, 2.0)              # Hermitian weights
    A_np = w[:, None] * C
    A_pad = np.zeros((Hp, Hp), dtype=np.float32)
    A_pad[:H, :H] = A_np
    A = jnp.asarray(A_pad, jnp.bfloat16)   # MXU operand; accumulation stays f32

    kernel = functools.partial(_fftcep_kernel, N=N, real_H=H,
                               n_iter=int(n_iter), accel=float(accel),
                               n_out=n_out, inv_L=float(1.0 / L))

    cost = pl.CostEstimate(
        flops=int(2 * Bp * Hp * Hp * (1 + 2 * int(n_iter))),
        transcendentals=int(Bp * Hp),
        bytes_accessed=int(4 * Bp * Hp + 2 * Hp * Hp + 4 * Bp * n_out))

    out = pl.pallas_call(
        kernel,
        out_shape=jax.ShapeDtypeStruct((Bp, n_out), jnp.float32),
        grid_spec=pltpu.PrefetchScalarGridSpec(
            num_scalar_prefetch=0,
            grid=(Bp // TB,),
            in_specs=[
                pl.BlockSpec((TB, Hp), lambda i: (i, 0)),   # x tile
                pl.BlockSpec((Hp, Hp), lambda i: (0, 0)),   # A (resident, DMA'd once)
            ],
            out_specs=pl.BlockSpec((TB, n_out), lambda i: (i, 0)),
        ),
        compiler_params=pltpu.CompilerParams(
            dimension_semantics=("parallel",),
            vmem_limit_bytes=vmem_limit),
        cost_estimate=cost,
    )(xf, A)

    v = out[:B, :N]
    return v.reshape(orig_shape[:-1] + (N,))


def cepstral_analysis_ref(x, cep_order, fft_length, n_iter=0, accel=0.0):
    """Pure-JAX f32 reference (mirrors the PyTorch code) for validation."""
    N = cep_order + 1
    H = x.shape[-1]
    x = x.astype(jnp.float32)
    e = jnp.fft.irfft(jnp.log(x))                       # (..., L)
    v = e[..., :N]
    pad_lead = [(0, 0)] * (x.ndim - 1)
    e = jnp.pad(e[..., N:H], pad_lead + [(N, 0)])
    for _ in range(n_iter):
        e = jnp.fft.hfft(e)
        e = jnp.where(e < 0, 0.0, e)
        e = jnp.fft.ihfft(e).real
        t = e[..., :N] * (1 + accel)
        v = v + t
        e = e - jnp.pad(t, pad_lead + [(0, H - N)])
    idx = np.array([0, N - 1] if H == N else [0])
    v = v.at[..., idx].multiply(0.5)
    return v


if __name__ == "__main__":
    cep_order = 4
    fft_length = 32
    n_iter = 3
    accel = 0.2
    H = fft_length // 2 + 1

    key = jax.random.PRNGKey(0)
    # Power spectrum must be strictly positive: 2 utterances x 30 frames x H bins
    # (B_flat = 60 -> exercises batch tiling and row/lane padding).
    x = jax.random.uniform(key, (2, 30, H), dtype=jnp.float32,
                           minval=0.1, maxval=4.0)

    out = cepstral_analysis(x, cep_order, fft_length, n_iter, accel)
    out = jax.block_until_ready(out)

    ref = cepstral_analysis_ref(x, cep_order, fft_length, n_iter, accel)
    # Tolerance covers bf16 MXU-operand rounding (accumulation is f32).
    np.testing.assert_allclose(np.asarray(out), np.asarray(ref),
                               rtol=5e-2, atol=5e-2)

    print("KERNEL_OK")
</pallas_src>

<mosaic_0001>
module attributes {stable_mosaic.version = 11 : i64} {
  func.func @_fftcep_kernel(%arg0: i32, %arg1: memref<64x128xf32, #tpu.memory_space<vmem>>, %arg2: memref<128x128xbf16, #tpu.memory_space<vmem>>, %arg3: memref<64x128xf32, #tpu.memory_space<vmem>>) attributes {dimension_semantics = [#tpu.dimension_semantics<parallel>], iteration_bounds = array<i64: 1>, scalar_prefetch = 0 : i64, scratch_operands = 0 : i64, tpu.core_type = #tpu.core_type<tc>, window_params = [{transform_indices = @transform_0, window_bounds = array<i64: 64, 128>}, {pipeline_mode = #tpu.pipeline_mode<synchronous>, transform_indices = @transform_1, window_bounds = array<i64: 128, 128>}, {transform_indices = @transform_2, window_bounds = array<i64: 64, 128>}]} {
    %c0 = arith.constant 0 : index
    %c0_0 = arith.constant 0 : index
    %0 = vector.load %arg1[%c0, %c0_0] : memref<64x128xf32, #tpu.memory_space<vmem>>, vector<64x128xf32>
    %1 = math.log %0 : vector<64x128xf32>
    %c0_1 = arith.constant 0 : index
    %c0_2 = arith.constant 0 : index
    %2 = vector.load %arg2[%c0_1, %c0_2] : memref<128x128xbf16, #tpu.memory_space<vmem>>, vector<128x128xbf16>
    %3 = arith.truncf %1 : vector<64x128xf32> to vector<64x128xbf16>
    %cst = arith.constant dense<0.000000e+00> : vector<64x128xf32>
    %4 = tpu.matmul %3, %2, %cst {dimension_numbers = #tpu.dot_dimension_numbers<[1], [0], [0], [1], [0, 0, 1, 1], [], []>} : vector<64x128xbf16>, vector<128x128xbf16>, vector<64x128xf32> -> vector<64x128xf32>
    %cst_3 = arith.constant 3.125000e-02 : f32
    %5 = vector.broadcast %cst_3 : f32 to vector<64x128xf32>
    %6 = arith.mulf %4, %5 : vector<64x128xf32>
    %7 = tpu.iota {dimensions = array<i32: 1>} : vector<64x128xi32>
    %c5_i32 = arith.constant 5 : i32
    %8 = vector.broadcast %c5_i32 : i32 to vector<64x128xi32>
    %9 = arith.cmpi slt, %7, %8 : vector<64x128xi32>
    %cst_4 = arith.constant 0.000000e+00 : f32
    %10 = vector.broadcast %cst_4 : f32 to vector<64x128xf32>
    %11 = arith.select %9, %6, %10 : vector<64x128xi1>, vector<64x128xf32>
    %cst_5 = arith.constant 0.000000e+00 : f32
    %12 = vector.broadcast %cst_5 : f32 to vector<64x128xf32>
    %13 = arith.select %9, %12, %6 : vector<64x128xi1>, vector<64x128xf32>
    %14 = arith.truncf %13 : vector<64x128xf32> to vector<64x128xbf16>
    %cst_6 = arith.constant dense<0.000000e+00> : vector<64x128xf32>
    %15 = tpu.matmul %14, %2, %cst_6 {dimension_numbers = #tpu.dot_dimension_numbers<[1], [0], [0], [1], [0, 0, 1, 1], [], []>} : vector<64x128xbf16>, vector<128x128xbf16>, vector<64x128xf32> -> vector<64x128xf32>
    %cst_7 = arith.constant 0.000000e+00 : f32
    %16 = vector.broadcast %cst_7 : f32 to vector<64x128xf32>
    %17 = arith.maximumf %15, %16 : vector<64x128xf32>
    %18 = arith.truncf %17 : vector<64x128xf32> to vector<64x128xbf16>
    %cst_8 = arith.constant dense<0.000000e+00> : vector<64x128xf32>
    %19 = tpu.matmul %18, %2, %cst_8 {dimension_numbers = #tpu.dot_dimension_numbers<[1], [0], [0], [1], [0, 0, 1, 1], [], []>} : vector<64x128xbf16>, vector<128x128xbf16>, vector<64x128xf32> -> vector<64x128xf32>
    %cst_9 = arith.constant 3.125000e-02 : f32
    %20 = vector.broadcast %cst_9 : f32 to vector<64x128xf32>
    %21 = arith.mulf %19, %20 : vector<64x128xf32>
    %cst_10 = arith.constant 1.200000e+00 : f32
    %22 = vector.broadcast %cst_10 : f32 to vector<64x128xf32>
    %23 = arith.mulf %21, %22 : vector<64x128xf32>
    %cst_11 = arith.constant 0.000000e+00 : f32
    %24 = vector.broadcast %cst_11 : f32 to vector<64x128xf32>
    %25 = arith.select %9, %23, %24 : vector<64x128xi1>, vector<64x128xf32>
    %26 = arith.addf %11, %25 : vector<64x128xf32>
    %27 = arith.subf %21, %25 : vector<64x128xf32>
    %28 = arith.truncf %27 : vector<64x128xf32> to vector<64x128xbf16>
    %cst_12 = arith.constant dense<0.000000e+00> : vector<64x128xf32>
    %29 = tpu.matmul %28, %2, %cst_12 {dimension_numbers = #tpu.dot_dimension_numbers<[1], [0], [0], [1], [0, 0, 1, 1], [], []>} : vector<64x128xbf16>, vector<128x128xbf16>, vector<64x128xf32> -> vector<64x128xf32>
    %cst_13 = arith.constant 0.000000e+00 : f32
    %30 = vector.broadcast %cst_13 : f32 to vector<64x128xf32>
    %31 = arith.maximumf %29, %30 : vector<64x128xf32>
    %32 = arith.truncf %31 : vector<64x128xf32> to vector<64x128xbf16>
    %cst_14 = arith.constant dense<0.000000e+00> : vector<64x128xf32>
    %33 = tpu.matmul %32, %2, %cst_14 {dimension_numbers = #tpu.dot_dimension_numbers<[1], [0], [0], [1], [0, 0, 1, 1], [], []>} : vector<64x128xbf16>, vector<128x128xbf16>, vector<64x128xf32> -> vector<64x128xf32>
    %cst_15 = arith.constant 3.125000e-02 : f32
    %34 = vector.broadcast %cst_15 : f32 to vector<64x128xf32>
    %35 = arith.mulf %33, %34 : vector<64x128xf32>
    %cst_16 = arith.constant 1.200000e+00 : f32
    %36 = vector.broadcast %cst_16 : f32 to vector<64x128xf32>
    %37 = arith.mulf %35, %36 : vector<64x128xf32>
    %cst_17 = arith.constant 0.000000e+00 : f32
    %38 = vector.broadcast %cst_17 : f32 to vector<64x128xf32>
    %39 = arith.select %9, %37, %38 : vector<64x128xi1>, vector<64x128xf32>
    %40 = arith.addf %26, %39 : vector<64x128xf32>
    %41 = arith.subf %35, %39 : vector<64x128xf32>
    %42 = arith.truncf %41 : vector<64x128xf32> to vector<64x128xbf16>
    %cst_18 = arith.constant dense<0.000000e+00> : vector<64x128xf32>
    %43 = tpu.matmul %42, %2, %cst_18 {dimension_numbers = #tpu.dot_dimension_numbers<[1], [0], [0], [1], [0, 0, 1, 1], [], []>} : vector<64x128xbf16>, vector<128x128xbf16>, vector<64x128xf32> -> vector<64x128xf32>
    %cst_19 = arith.constant 0.000000e+00 : f32
    %44 = vector.broadcast %cst_19 : f32 to vector<64x128xf32>
    %45 = arith.maximumf %43, %44 : vector<64x128xf32>
    %46 = arith.truncf %45 : vector<64x128xf32> to vector<64x128xbf16>
    %cst_20 = arith.constant dense<0.000000e+00> : vector<64x128xf32>
    %47 = tpu.matmul %46, %2, %cst_20 {dimension_numbers = #tpu.dot_dimension_numbers<[1], [0], [0], [1], [0, 0, 1, 1], [], []>} : vector<64x128xbf16>, vector<128x128xbf16>, vector<64x128xf32> -> vector<64x128xf32>
    %cst_21 = arith.constant 3.125000e-02 : f32
    %48 = vector.broadcast %cst_21 : f32 to vector<64x128xf32>
    %49 = arith.mulf %47, %48 : vector<64x128xf32>
    %cst_22 = arith.constant 1.200000e+00 : f32
    %50 = vector.broadcast %cst_22 : f32 to vector<64x128xf32>
    %51 = arith.mulf %49, %50 : vector<64x128xf32>
    %cst_23 = arith.constant 0.000000e+00 : f32
    %52 = vector.broadcast %cst_23 : f32 to vector<64x128xf32>
    %53 = arith.select %9, %51, %52 : vector<64x128xi1>, vector<64x128xf32>
    %54 = arith.addf %40, %53 : vector<64x128xf32>
    %c0_i32 = arith.constant 0 : i32
    %55 = vector.broadcast %c0_i32 : i32 to vector<64x128xi32>
    %56 = arith.cmpi eq, %7, %55 : vector<64x128xi32>
    %cst_24 = arith.constant 5.000000e-01 : f32
    %cst_25 = arith.constant 1.000000e+00 : f32
    %57 = vector.broadcast %cst_24 : f32 to vector<64x128xf32>
    %58 = vector.broadcast %cst_25 : f32 to vector<64x128xf32>
    %59 = arith.select %56, %57, %58 : vector<64x128xi1>, vector<64x128xf32>
    %60 = arith.mulf %54, %59 : vector<64x128xf32>
    %c0_26 = arith.constant 0 : index
    %c0_27 = arith.constant 0 : index
    %61 = vector.load %arg3[%c0_26, %c0_27] : memref<64x128xf32, #tpu.memory_space<vmem>>, vector<64x128xf32>
    tpu.vector_store %arg3[%c0_26, %c0_27], %60 {strides = array<i32>} : memref<64x128xf32, #tpu.memory_space<vmem>>, vector<64x128xf32>,
    return
  }
  func.func @transform_0(%arg0: i32) -> (i32, i32) {
    %c0_i32 = arith.constant 0 : i32
    %c0_i32_0 = arith.constant 0 : i32
    return %arg0, %c0_i32 : i32, i32
  }
  func.func @transform_1(%arg0: i32) -> (i32, i32) {
    %c0_i32 = arith.constant 0 : i32
    %c0_i32_0 = arith.constant 0 : i32
    %c0_i32_1 = arith.constant 0 : i32
    return %c0_i32, %c0_i32_0 : i32, i32
  }
  func.func @transform_2(%arg0: i32) -> (i32, i32) {
    %c0_i32 = arith.constant 0 : i32
    %c0_i32_0 = arith.constant 0 : i32
    return %arg0, %c0_i32 : i32, i32
  }
}

</mosaic_0001>

<llo_original>
// kernel: tpu_custom_call.1
$region0: #{tpu_custom_call.1}
  #allocation0 [shape = 'u32[]', space=smem, size = 0x4, offset = 0x4, fixed_abs, tag = 'smem constant byte address 0x4 - core index']
  #allocation1 [shape = 'u32[144,128]{1,0:T(1,128)}', space=vmem, size = 0x12000, scoped, tag = 'internal scratch']
  %s0 = inlined_call_operand.hbm [shape: f32[64,128], index: 0, kind: input, shape index: {}]
  %s1 = inlined_call_operand.hbm [shape: bf16[128,128], index: 1, kind: input, shape index: {}]
  %s2 = inlined_call_operand.hbm [shape: f32[64,128], index: 2, kind: output, shape index: {}]
  %s3 = sld [smem:[#allocation0]]
  $region26: #{tpu_custom_call.1} parent=0
    _
  %s5 = ssub.s32 1, %s3
  %s6 = scalar_select 0, %s5, %s3
  $region1: #{tpu_custom_call.1} parent=0
    #allocation2 [shape = 'u8[32768]{0}', space=vmem, size = 0x8000, scoped, tag = 'input window, operand 0, single buffered']
    #allocation3 [shape = 's32[1]{0}', space=sflag, size = 0x4, scoped, tag = 'scoped memory for tpu_custom_call.1']
    #allocation4 [shape = 's32[1]{0}', space=sflag, size = 0x4, scoped, tag = 'scoped memory for tpu_custom_call.1']
    #allocation5 [shape = 'u8[32768]{0}', space=vmem, size = 0x8000, scoped, tag = 'input window, operand 1, single buffered']
    #allocation6 [shape = 's32[1]{0}', space=sflag, size = 0x4, scoped, tag = 'scoped memory for tpu_custom_call.1']
    #allocation7 [shape = 'u8[32768]{0}', space=vmem, size = 0x8000, scoped, tag = 'output window, operand 0, single buffered']
    %7 = vsyncpa [#allocation3], 0
    %8 = vsyncpa [#allocation6], 0
    %9 = vsyncpa [#allocation4], 0
    // Predicated region
    $region2: #{tpu_custom_call.1} parent=1 // pred_check
      _
    $region3: #{tpu_custom_call.1} parent=1 // pred_check_branch
      %11 = sbr.rel (0) target = $region5
    $region4: #{tpu_custom_call.1} parent=1 // pred_region
      %s13 = ssub.s32 1024, 1024
      %14 = vsyncadd [#allocation3], %s13
      %s15 = sshll.u32 [#allocation2], 4
      %s16 = int_to_ptr.vmem [resolvable:$true] %s15
      %21 = dma.hbm_to_vmem [thread:$0]  %s0, 1024, %s16, [#allocation3], 128, 128, 8
    $region5: #{tpu_custom_call.1} parent=1 // pred_fallthru
      _
    // Predicated region
    $region6: #{tpu_custom_call.1} parent=1 // pred_check
      _
    $region7: #{tpu_custom_call.1} parent=1 // pred_check_branch
      %23 = sbr.rel (0) target = $region9
    $region8: #{tpu_custom_call.1} parent=1 // pred_region
      %s25 = ssub.s32 1024, 1024
      %26 = vsyncadd [#allocation6], %s25
      %s27 = sshll.u32 [#allocation5], 4
      %s28 = int_to_ptr.vmem [resolvable:$true] %s27
      %33 = dma.hbm_to_vmem [thread:$0]  %s1, 1024, %s28, [#allocation6], 64, 64, 4
    $region9: #{tpu_custom_call.1} parent=1 // pred_fallthru
      _
    // Predicated region
    $region10: #{tpu_custom_call.1} parent=1 // pred_check
      _
    $region11: #{tpu_custom_call.1} parent=1 // pred_check_branch
      %35 = sbr.rel (0) target = $region13
    $region12: #{tpu_custom_call.1} parent=1 // pred_region
      %36 = dma.done [#allocation3], 1024
    $region13: #{tpu_custom_call.1} parent=1 // pred_fallthru
      _
    // Predicated region
    $region14: #{tpu_custom_call.1} parent=1 // pred_check
      _
    $region15: #{tpu_custom_call.1} parent=1 // pred_check_branch
      %38 = sbr.rel (0) target = $region17
    $region16: #{tpu_custom_call.1} parent=1 // pred_region
      %39 = dma.done [#allocation6], 1024
    $region17: #{tpu_custom_call.1} parent=1 // pred_fallthru
      _
    %v41 = vld [vmem:[#allocation2] sm:$0xff]
    %v42 = vld [vmem:[#allocation2 + $0x8] sm:$0xff]
    %v43 = vld [vmem:[#allocation2 + $0x10] sm:$0xff]
    %v44 = vld [vmem:[#allocation2 + $0x18] sm:$0xff]
    %v45 = vld [vmem:[#allocation2 + $0x20] sm:$0xff]
    %v46 = vld [vmem:[#allocation2 + $0x28] sm:$0xff]
    %v47 = vld [vmem:[#allocation2 + $0x30] sm:$0xff]
    %v48 = vld [vmem:[#allocation2 + $0x38] sm:$0xff]
    %v49 = vlog2.pop %v41
    %v50 = vmul.f32 %v49, 0.6931472
    %v51 = vlog2.pop %v42
    %v52 = vmul.f32 %v51, 0.6931472
    %v53 = vlog2.pop %v43
    %v54 = vmul.f32 %v53, 0.6931472
    %v55 = vlog2.pop %v44
    %v56 = vmul.f32 %v55, 0.6931472
    %v57 = vlog2.pop %v45
    %v58 = vmul.f32 %v57, 0.6931472
    %v59 = vlog2.pop %v46
    %v60 = vmul.f32 %v59, 0.6931472
    %v61 = vlog2.pop %v47
    %v62 = vmul.f32 %v61, 0.6931472
    %v63 = vlog2.pop %v48
    %v64 = vmul.f32 %v63, 0.6931472
    %v65 = vld [vmem:[#allocation5] sm:$0xf]
    %v66 = vld [vmem:[#allocation5 + $0x4] sm:$0xf]
    %v67 = vld [vmem:[#allocation5 + $0x8] sm:$0xf]
    %v68 = vld [vmem:[#allocation5 + $0xc] sm:$0xf]
    %v69 = vld [vmem:[#allocation5 + $0x10] sm:$0xf]
    %v70 = vld [vmem:[#allocation5 + $0x14] sm:$0xf]
    %v71 = vld [vmem:[#allocation5 + $0x18] sm:$0xf]
    %v72 = vld [vmem:[#allocation5 + $0x1c] sm:$0xf]
    %v73 = vld [vmem:[#allocation5 + $0x20] sm:$0xf]
    %v74 = vld [vmem:[#allocation5 + $0x24] sm:$0xf]
    %v75 = vld [vmem:[#allocation5 + $0x28] sm:$0xf]
    %v76 = vld [vmem:[#allocation5 + $0x2c] sm:$0xf]
    %v77 = vld [vmem:[#allocation5 + $0x30] sm:$0xf]
    %v78 = vld [vmem:[#allocation5 + $0x34] sm:$0xf]
    %v79 = vld [vmem:[#allocation5 + $0x38] sm:$0xf]
    %v80 = vld [vmem:[#allocation5 + $0x3c] sm:$0xf]
    %v81 = vpack.c.bf16 %v52, %v50
    %v82 = vpack.c.bf16 %v56, %v54
    %v83 = vpack.c.bf16 %v60, %v58
    %v84 = vpack.c.bf16 %v64, %v62
    %v101 = vunpack.c.l.b16 %v65
    %v102 = vunpack.c.l.b16 %v66
    %v103 = vunpack.c.l.b16 %v67
    %v104 = vunpack.c.l.b16 %v68
    %v105 = vunpack.c.l.b16 %v69
    %v106 = vunpack.c.l.b16 %v70
    %v107 = vunpack.c.l.b16 %v71
    %v108 = vunpack.c.l.b16 %v72
    %v109 = vunpack.c.l.b16 %v73
    %v110 = vunpack.c.l.b16 %v74
    %v111 = vunpack.c.l.b16 %v75
    %v112 = vunpack.c.l.b16 %v76
    %v113 = vunpack.c.l.b16 %v77
    %v114 = vunpack.c.l.b16 %v78
    %v115 = vunpack.c.l.b16 %v79
    %v116 = vunpack.c.l.b16 %v80
    %v117 = vpack.c.b16 %v102, %v101
    %v118 = vpack.c.b16 %v104, %v103
    %v119 = vpack.c.b16 %v106, %v105
    %v120 = vpack.c.b16 %v108, %v107
    %v121 = vpack.c.b16 %v110, %v109
    %v122 = vpack.c.b16 %v112, %v111
    %v123 = vpack.c.b16 %v114, %v113
    %v124 = vpack.c.b16 %v116, %v115
    %133 = vmatprep.subr.bf16.mxu0 0
    %134 = vmatpush1.bf16.msra.mxu0 %v124
    %135 = vmatprep.subr.bf16.mxu0 0
    %136 = vmatpush1.bf16.msra.mxu0 %v123
    %137 = vmatprep.subr.bf16.mxu0 0
    %138 = vmatpush1.bf16.msra.mxu0 %v122
    %139 = vmatprep.subr.bf16.mxu0 0
    %140 = vmatpush1.bf16.msra.mxu0 %v121
    %141 = vmatprep.subr.bf16.mxu0 0
    %142 = vmatpush1.bf16.msra.mxu0 %v120
    %143 = vmatprep.subr.bf16.mxu0 0
    %144 = vmatpush1.bf16.msra.mxu0 %v119
    %145 = vmatprep.subr.bf16.mxu0 0
    %146 = vmatpush1.bf16.msra.mxu0 %v118
    %147 = vmatprep.subr.bf16.mxu0 0
    %148 = vmatpush1.bf16.msra.mxu0 %v117
    %149 = vmatprep.subr.bf16.mxu0 0
    %150 = vmatpush2.bf16.msra.mxu0 0
    %151 = vmatprep.subr.bf16.mxu0 0
    %152 = vmatpush2.bf16.msra.mxu0 0
    %153 = vmatprep.subr.bf16.mxu0 0
    %154 = vmatpush2.bf16.msra.mxu0 0
    %155 = vmatprep.subr.bf16.mxu0 0
    %156 = vmatpush2.bf16.msra.mxu0 0
    %157 = vmatprep.subr.bf16.mxu0 0
    %158 = vmatpush2.bf16.msra.mxu0 0
    %159 = vmatprep.subr.bf16.mxu0 0
    %160 = vmatpush2.bf16.msra.mxu0 0
    %161 = vmatprep.subr.bf16.mxu0 0
    %162 = vmatpush2.bf16.msra.mxu0 0
    %163 = vmatprep.subr.bf16.mxu0 0
    %164 = vmatpush2.bf16.msra.mxu0 0
    %165 = vmatprep.mubr.bf16.mxu0 0
    %166 = vmatmul.mubr.bf16.gmra.mxu0 %v81
    %v167 = vpop.f32.mrf.mxu0
    %v168 = vadd.f32 0.0, %v167
    %v169 = vpop.f32.mrf.mxu0
    %v170 = vpop.f32.mrf.mxu0
    %v171 = vadd.f32 0.0, %v170
    %v172 = vpop.f32.mrf.mxu0
    %173 = vmatprep.mubr.bf16.mxu0 0
    %174 = vmatmul.mubr.bf16.gmra.mxu0 %v82
    %v175 = vpop.f32.mrf.mxu0
    %v176 = vadd.f32 0.0, %v175
    %v177 = vpop.f32.mrf.mxu0
    %v178 = vpop.f32.mrf.mxu0
    %v179 = vadd.f32 0.0, %v178
    %v180 = vpop.f32.mrf.mxu0
    %181 = vmatprep.mubr.bf16.mxu0 0
    %182 = vmatmul.mubr.bf16.gmra.mxu0 %v83
    %v183 = vpop.f32.mrf.mxu0
    %v184 = vadd.f32 0.0, %v183
    %v185 = vpop.f32.mrf.mxu0
    %v186 = vpop.f32.mrf.mxu0
    %v187 = vadd.f32 0.0, %v186
    %v188 = vpop.f32.mrf.mxu0
    %189 = vmatprep.mubr.bf16.mxu0 0
    %190 = vmatmul.mubr.bf16.gmra.mxu0 %v84
    %v191 = vpop.f32.mrf.mxu0
    %v192 = vadd.f32 0.0, %v191
    %v193 = vpop.f32.mrf.mxu0
    %v194 = vpop.f32.mrf.mxu0
    %v195 = vadd.f32 0.0, %v194
    %v196 = vpop.f32.mrf.mxu0
    %197 = vdwg.mxu0
    %v198 = vmul.f32 %v168, 0.03125
    %v199 = vmul.f32 %v171, 0.03125
    %v200 = vmul.f32 %v176, 0.03125
    %v201 = vmul.f32 %v179, 0.03125
    %v202 = vmul.f32 %v184, 0.03125
    %v203 = vmul.f32 %v187, 0.03125
    %v204 = vmul.f32 %v192, 0.03125
    %v205 = vmul.f32 %v195, 0.03125
    %v206 = vlaneseq
    %v207 = vand.u32 %v206, 127
    %vm208 = vcmp.lt.s32.totalorder %v207, 5
    %v209 = vsel %vm208, %v198, 0.0
    %v210 = vsel %vm208, %v199, 0.0
    %v211 = vsel %vm208, %v200, 0.0
    %v212 = vsel %vm208, %v201, 0.0
    %v213 = vsel %vm208, %v202, 0.0
    %v214 = vsel %vm208, %v203, 0.0
    %v215 = vsel %vm208, %v204, 0.0
    %v216 = vsel %vm208, %v205, 0.0
    %v217 = vsel %vm208, 0.0, %v198
    %v218 = vsel %vm208, 0.0, %v199
    %v219 = vsel %vm208, 0.0, %v200
    %v220 = vsel %vm208, 0.0, %v201
    %v221 = vsel %vm208, 0.0, %v202
    %v222 = vsel %vm208, 0.0, %v203
    %v223 = vsel %vm208, 0.0, %v204
    %v224 = vsel %vm208, 0.0, %v205
    %v225 = vpack.c.bf16 %v218, %v217
    %v226 = vpack.c.bf16 %v220, %v219
    %v227 = vpack.c.bf16 %v222, %v221
    %v228 = vpack.c.bf16 %v224, %v223
    %229 = vmatprep.subr.bf16.mxu0 0
    %230 = vmatpush1.bf16.msra.mxu0 %v124
    %231 = vmatprep.subr.bf16.mxu0 0
    %232 = vmatpush1.bf16.msra.mxu0 %v123
    %233 = vmatprep.subr.bf16.mxu0 0
    %234 = vmatpush1.bf16.msra.mxu0 %v122
    %235 = vmatprep.subr.bf16.mxu0 0
    %236 = vmatpush1.bf16.msra.mxu0 %v121
    %237 = vmatprep.subr.bf16.mxu0 0
    %238 = vmatpush1.bf16.msra.mxu0 %v120
    %239 = vmatprep.subr.bf16.mxu0 0
    %240 = vmatpush1.bf16.msra.mxu0 %v119
    %241 = vmatprep.subr.bf16.mxu0 0
    %242 = vmatpush1.bf16.msra.mxu0 %v118
    %243 = vmatprep.subr.bf16.mxu0 0
    %244 = vmatpush1.bf16.msra.mxu0 %v117
    %245 = vmatprep.subr.bf16.mxu0 0
    %246 = vmatpush2.bf16.msra.mxu0 0
    %247 = vmatprep.subr.bf16.mxu0 0
    %248 = vmatpush2.bf16.msra.mxu0 0
    %249 = vmatprep.subr.bf16.mxu0 0
    %250 = vmatpush2.bf16.msra.mxu0 0
    %251 = vmatprep.subr.bf16.mxu0 0
    %252 = vmatpush2.bf16.msra.mxu0 0
    %253 = vmatprep.subr.bf16.mxu0 0
    %254 = vmatpush2.bf16.msra.mxu0 0
    %255 = vmatprep.subr.bf16.mxu0 0
    %256 = vmatpush2.bf16.msra.mxu0 0
    %257 = vmatprep.subr.bf16.mxu0 0
    %258 = vmatpush2.bf16.msra.mxu0 0
    %259 = vmatprep.subr.bf16.mxu0 0
    %260 = vmatpush2.bf16.msra.mxu0 0
    %261 = vmatprep.mubr.bf16.mxu0 0
    %262 = vmatmul.mubr.bf16.gmra.mxu0 %v225
    %v263 = vpop.f32.mrf.mxu0
    %v264 = vadd.f32 0.0, %v263
    %v265 = vpop.f32.mrf.mxu0
    %v266 = vpop.f32.mrf.mxu0
    %v267 = vadd.f32 0.0, %v266
    %v268 = vpop.f32.mrf.mxu0
    %269 = vmatprep.mubr.bf16.mxu0 0
    %270 = vmatmul.mubr.bf16.gmra.mxu0 %v226
    %v271 = vpop.f32.mrf.mxu0
    %v272 = vadd.f32 0.0, %v271
    %v273 = vpop.f32.mrf.mxu0
    %v274 = vpop.f32.mrf.mxu0
    %v275 = vadd.f32 0.0, %v274
    %v276 = vpop.f32.mrf.mxu0
    %277 = vmatprep.mubr.bf16.mxu0 0
    %278 = vmatmul.mubr.bf16.gmra.mxu0 %v227
    %v279 = vpop.f32.mrf.mxu0
    %v280 = vadd.f32 0.0, %v279
    %v281 = vpop.f32.mrf.mxu0
    %v282 = vpop.f32.mrf.mxu0
    %v283 = vadd.f32 0.0, %v282
    %v284 = vpop.f32.mrf.mxu0
    %285 = vmatprep.mubr.bf16.mxu0 0
    %286 = vmatmul.mubr.bf16.gmra.mxu0 %v228
    %v287 = vpop.f32.mrf.mxu0
    %v288 = vadd.f32 0.0, %v287
    %v289 = vpop.f32.mrf.mxu0
    %v290 = vpop.f32.mrf.mxu0
    %v291 = vadd.f32 0.0, %v290
    %v292 = vpop.f32.mrf.mxu0
    %293 = vdwg.mxu0
    %v294 = vmax.f32 %v264, 0.0
    %v295 = vmax.f32 %v267, 0.0
    %v296 = vmax.f32 %v272, 0.0
    %v297 = vmax.f32 %v275, 0.0
    %v298 = vmax.f32 %v280, 0.0
    %v299 = vmax.f32 %v283, 0.0
    %v300 = vmax.f32 %v288, 0.0
    %v301 = vmax.f32 %v291, 0.0
    %v302 = vpack.c.bf16 %v295, %v294
    %v303 = vpack.c.bf16 %v297, %v296
    %v304 = vpack.c.bf16 %v299, %v298
    %v305 = vpack.c.bf16 %v301, %v300
    %306 = vmatprep.subr.bf16.mxu0 0
    %307 = vmatpush1.bf16.msra.mxu0 %v124
    %308 = vmatprep.subr.bf16.mxu0 0
    %309 = vmatpush1.bf16.msra.mxu0 %v123
    %310 = vmatprep.subr.bf16.mxu0 0
    %311 = vmatpush1.bf16.msra.mxu0 %v122
    %312 = vmatprep.subr.bf16.mxu0 0
    %313 = vmatpush1.bf16.msra.mxu0 %v121
    %314 = vmatprep.subr.bf16.mxu0 0
    %315 = vmatpush1.bf16.msra.mxu0 %v120
    %316 = vmatprep.subr.bf16.mxu0 0
    %317 = vmatpush1.bf16.msra.mxu0 %v119
    %318 = vmatprep.subr.bf16.mxu0 0
    %319 = vmatpush1.bf16.msra.mxu0 %v118
    %320 = vmatprep.subr.bf16.mxu0 0
    %321 = vmatpush1.bf16.msra.mxu0 %v117
    %322 = vmatprep.subr.bf16.mxu0 0
    %323 = vmatpush2.bf16.msra.mxu0 0
    %324 = vmatprep.subr.bf16.mxu0 0
    %325 = vmatpush2.bf16.msra.mxu0 0
    %326 = vmatprep.subr.bf16.mxu0 0
    %327 = vmatpush2.bf16.msra.mxu0 0
    %328 = vmatprep.subr.bf16.mxu0 0
    %329 = vmatpush2.bf16.msra.mxu0 0
    %330 = vmatprep.subr.bf16.mxu0 0
    %331 = vmatpush2.bf16.msra.mxu0 0
    %332 = vmatprep.subr.bf16.mxu0 0
    %333 = vmatpush2.bf16.msra.mxu0 0
    %334 = vmatprep.subr.bf16.mxu0 0
    %335 = vmatpush2.bf16.msra.mxu0 0
    %336 = vmatprep.subr.bf16.mxu0 0
    %337 = vmatpush2.bf16.msra.mxu0 0
    %338 = vmatprep.mubr.bf16.mxu0 0
    %339 = vmatmul.mubr.bf16.gmra.mxu0 %v302
    %v340 = vpop.f32.mrf.mxu0
    %v341 = vadd.f32 0.0, %v340
    %v342 = vpop.f32.mrf.mxu0
    %v343 = vpop.f32.mrf.mxu0
    %v344 = vadd.f32 0.0, %v343
    %v345 = vpop.f32.mrf.mxu0
    %346 = vmatprep.mubr.bf16.mxu0 0
    %347 = vmatmul.mubr.bf16.gmra.mxu0 %v303
    %v348 = vpop.f32.mrf.mxu0
    %v349 = vadd.f32 0.0, %v348
    %v350 = vpop.f32.mrf.mxu0
    %v351 = vpop.f32.mrf.mxu0
    %v352 = vadd.f32 0.0, %v351
    %v353 = vpop.f32.mrf.mxu0
    %354 = vmatprep.mubr.bf16.mxu0 0
    %355 = vmatmul.mubr.bf16.gmra.mxu0 %v304
    %v356 = vpop.f32.mrf.mxu0
    %v357 = vadd.f32 0.0, %v356
    %v358 = vpop.f32.mrf.mxu0
    %v359 = vpop.f32.mrf.mxu0
    %v360 = vadd.f32 0.0, %v359
    %v361 = vpop.f32.mrf.mxu0
    %362 = vmatprep.mubr.bf16.mxu0 0
    %363 = vmatmul.mubr.bf16.gmra.mxu0 %v305
    %v364 = vpop.f32.mrf.mxu0
    %v365 = vadd.f32 0.0, %v364
    %v366 = vpop.f32.mrf.mxu0
    %v367 = vpop.f32.mrf.mxu0
    %v368 = vadd.f32 0.0, %v367
    %v369 = vpop.f32.mrf.mxu0
    %370 = vdwg.mxu0
    %v371 = vmul.f32 %v341, 0.03125
    %v372 = vmul.f32 %v344, 0.03125
    %v373 = vmul.f32 %v349, 0.03125
    %v374 = vmul.f32 %v352, 0.03125
    %v375 = vmul.f32 %v357, 0.03125
    %v376 = vmul.f32 %v360, 0.03125
    %v377 = vmul.f32 %v365, 0.03125
    %v378 = vmul.f32 %v368, 0.03125
    %v379 = vmul.f32 %v371, 1.2
    %v380 = vmul.f32 %v372, 1.2
    %v381 = vmul.f32 %v373, 1.2
    %v382 = vmul.f32 %v374, 1.2
    %v383 = vmul.f32 %v375, 1.2
    %v384 = vmul.f32 %v376, 1.2
    %v385 = vmul.f32 %v377, 1.2
    %v386 = vmul.f32 %v378, 1.2
    %v387 = vsel %vm208, %v379, 0.0
    %v388 = vsel %vm208, %v380, 0.0
    %v389 = vsel %vm208, %v381, 0.0
    %v390 = vsel %vm208, %v382, 0.0
    %v391 = vsel %vm208, %v383, 0.0
    %v392 = vsel %vm208, %v384, 0.0
    %v393 = vsel %vm208, %v385, 0.0
    %v394 = vsel %vm208, %v386, 0.0
    %v395 = vadd.f32 %v209, %v387
    %v396 = vadd.f32 %v210, %v388
    %v397 = vadd.f32 %v211, %v389
    %v398 = vadd.f32 %v212, %v390
    %v399 = vadd.f32 %v213, %v391
    %v400 = vadd.f32 %v214, %v392
    %v401 = vadd.f32 %v215, %v393
    %v402 = vadd.f32 %v216, %v394
    %v403 = vsub.f32 %v371, %v387
    %v404 = vsub.f32 %v372, %v388
    %v405 = vsub.f32 %v373, %v389
    %v406 = vsub.f32 %v374, %v390
    %v407 = vsub.f32 %v375, %v391
    %v408 = vsub.f32 %v376, %v392
    %v409 = vsub.f32 %v377, %v393
    %v410 = vsub.f32 %v378, %v394
    %v411 = vpack.c.bf16 %v404, %v403
    %v412 = vpack.c.bf16 %v406, %v405
    %v413 = vpack.c.bf16 %v408, %v407
    %v414 = vpack.c.bf16 %v410, %v409
    %415 = vmatprep.subr.bf16.mxu0 0
    %416 = vmatpush1.bf16.msra.mxu0 %v124
    %417 = vmatprep.subr.bf16.mxu0 0
    %418 = vmatpush1.bf16.msra.mxu0 %v123
    %419 = vmatprep.subr.bf16.mxu0 0
    %420 = vmatpush1.bf16.msra.mxu0 %v122
    %421 = vmatprep.subr.bf16.mxu0 0
    %422 = vmatpush1.bf16.msra.mxu0 %v121
    %423 = vmatprep.subr.bf16.mxu0 0
    %424 = vmatpush1.bf16.msra.mxu0 %v120
    %425 = vmatprep.subr.bf16.mxu0 0
    %426 = vmatpush1.bf16.msra.mxu0 %v119
    %427 = vmatprep.subr.bf16.mxu0 0
    %428 = vmatpush1.bf16.msra.mxu0 %v118
    %429 = vmatprep.subr.bf16.mxu0 0
    %430 = vmatpush1.bf16.msra.mxu0 %v117
    %431 = vmatprep.subr.bf16.mxu0 0
    %432 = vmatpush2.bf16.msra.mxu0 0
    %433 = vmatprep.subr.bf16.mxu0 0
    %434 = vmatpush2.bf16.msra.mxu0 0
    %435 = vmatprep.subr.bf16.mxu0 0
    %436 = vmatpush2.bf16.msra.mxu0 0
    %437 = vmatprep.subr.bf16.mxu0 0
    %438 = vmatpush2.bf16.msra.mxu0 0
    %439 = vmatprep.subr.bf16.mxu0 0
    %440 = vmatpush2.bf16.msra.mxu0 0
    %441 = vmatprep.subr.bf16.mxu0 0
    %442 = vmatpush2.bf16.msra.mxu0 0
    %443 = vmatprep.subr.bf16.mxu0 0
    %444 = vmatpush2.bf16.msra.mxu0 0
    %445 = vmatprep.subr.bf16.mxu0 0
    %446 = vmatpush2.bf16.msra.mxu0 0
    %447 = vmatprep.mubr.bf16.mxu0 0
    %448 = vmatmul.mubr.bf16.gmra.mxu0 %v411
    %v449 = vpop.f32.mrf.mxu0
    %v450 = vadd.f32 0.0, %v449
    %v451 = vpop.f32.mrf.mxu0
    %v452 = vpop.f32.mrf.mxu0
    %v453 = vadd.f32 0.0, %v452
    %v454 = vpop.f32.mrf.mxu0
    %455 = vmatprep.mubr.bf16.mxu0 0
    %456 = vmatmul.mubr.bf16.gmra.mxu0 %v412
    %v457 = vpop.f32.mrf.mxu0
    %v458 = vadd.f32 0.0, %v457
    %v459 = vpop.f32.mrf.mxu0
    %v460 = vpop.f32.mrf.mxu0
    %v461 = vadd.f32 0.0, %v460
    %v462 = vpop.f32.mrf.mxu0
    %463 = vmatprep.mubr.bf16.mxu0 0
    %464 = vmatmul.mubr.bf16.gmra.mxu0 %v413
    %v465 = vpop.f32.mrf.mxu0
    %v466 = vadd.f32 0.0, %v465
    %v467 = vpop.f32.mrf.mxu0
    %v468 = vpop.f32.mrf.mxu0
    %v469 = vadd.f32 0.0, %v468
    %v470 = vpop.f32.mrf.mxu0
    %471 = vmatprep.mubr.bf16.mxu0 0
    %472 = vmatmul.mubr.bf16.gmra.mxu0 %v414
    %v473 = vpop.f32.mrf.mxu0
    %v474 = vadd.f32 0.0, %v473
    %v475 = vpop.f32.mrf.mxu0
    %v476 = vpop.f32.mrf.mxu0
    %v477 = vadd.f32 0.0, %v476
    %v478 = vpop.f32.mrf.mxu0
    %479 = vdwg.mxu0
    %v480 = vmax.f32 %v450, 0.0
    %v481 = vmax.f32 %v453, 0.0
    %v482 = vmax.f32 %v458, 0.0
    %v483 = vmax.f32 %v461, 0.0
    %v484 = vmax.f32 %v466, 0.0
    %v485 = vmax.f32 %v469, 0.0
    %v486 = vmax.f32 %v474, 0.0
    %v487 = vmax.f32 %v477, 0.0
    %v488 = vpack.c.bf16 %v481, %v480
    %v489 = vpack.c.bf16 %v483, %v482
    %v490 = vpack.c.bf16 %v485, %v484
    %v491 = vpack.c.bf16 %v487, %v486
    %492 = vmatprep.subr.bf16.mxu0 0
    %493 = vmatpush1.bf16.msra.mxu0 %v124
    %494 = vmatprep.subr.bf16.mxu0 0
    %495 = vmatpush1.bf16.msra.mxu0 %v123
    %496 = vmatprep.subr.bf16.mxu0 0
    %497 = vmatpush1.bf16.msra.mxu0 %v122
    %498 = vmatprep.subr.bf16.mxu0 0
    %499 = vmatpush1.bf16.msra.mxu0 %v121
    %500 = vmatprep.subr.bf16.mxu0 0
    %501 = vmatpush1.bf16.msra.mxu0 %v120
    %502 = vmatprep.subr.bf16.mxu0 0
    %503 = vmatpush1.bf16.msra.mxu0 %v119
    %504 = vmatprep.subr.bf16.mxu0 0
    %505 = vmatpush1.bf16.msra.mxu0 %v118
    %506 = vmatprep.subr.bf16.mxu0 0
    %507 = vmatpush1.bf16.msra.mxu0 %v117
    %508 = vmatprep.subr.bf16.mxu0 0
    %509 = vmatpush2.bf16.msra.mxu0 0
    %510 = vmatprep.subr.bf16.mxu0 0
    %511 = vmatpush2.bf16.msra.mxu0 0
    %512 = vmatprep.subr.bf16.mxu0 0
    %513 = vmatpush2.bf16.msra.mxu0 0
    %514 = vmatprep.subr.bf16.mxu0 0
    %515 = vmatpush2.bf16.msra.mxu0 0
    %516 = vmatprep.subr.bf16.mxu0 0
    %517 = vmatpush2.bf16.msra.mxu0 0
    %518 = vmatprep.subr.bf16.mxu0 0
    %519 = vmatpush2.bf16.msra.mxu0 0
    %520 = vmatprep.subr.bf16.mxu0 0
    %521 = vmatpush2.bf16.msra.mxu0 0
    %522 = vmatprep.subr.bf16.mxu0 0
    %523 = vmatpush2.bf16.msra.mxu0 0
    %524 = vmatprep.mubr.bf16.mxu0 0
    %525 = vmatmul.mubr.bf16.gmra.mxu0 %v488
    %v526 = vpop.f32.mrf.mxu0
    %v527 = vadd.f32 0.0, %v526
    %v528 = vpop.f32.mrf.mxu0
    %v529 = vpop.f32.mrf.mxu0
    %v530 = vadd.f32 0.0, %v529
    %v531 = vpop.f32.mrf.mxu0
    %532 = vmatprep.mubr.bf16.mxu0 0
    %533 = vmatmul.mubr.bf16.gmra.mxu0 %v489
    %v534 = vpop.f32.mrf.mxu0
    %v535 = vadd.f32 0.0, %v534
    %v536 = vpop.f32.mrf.mxu0
    %v537 = vpop.f32.mrf.mxu0
    %v538 = vadd.f32 0.0, %v537
    %v539 = vpop.f32.mrf.mxu0
    %540 = vmatprep.mubr.bf16.mxu0 0
    %541 = vmatmul.mubr.bf16.gmra.mxu0 %v490
    %v542 = vpop.f32.mrf.mxu0
    %v543 = vadd.f32 0.0, %v542
    %v544 = vpop.f32.mrf.mxu0
    %v545 = vpop.f32.mrf.mxu0
    %v546 = vadd.f32 0.0, %v545
    %v547 = vpop.f32.mrf.mxu0
    %548 = vmatprep.mubr.bf16.mxu0 0
    %549 = vmatmul.mubr.bf16.gmra.mxu0 %v491
    %v550 = vpop.f32.mrf.mxu0
    %v551 = vadd.f32 0.0, %v550
    %v552 = vpop.f32.mrf.mxu0
    %v553 = vpop.f32.mrf.mxu0
    %v554 = vadd.f32 0.0, %v553
    %v555 = vpop.f32.mrf.mxu0
    %556 = vdwg.mxu0
    %v557 = vmul.f32 %v527, 0.03125
    %v558 = vmul.f32 %v530, 0.03125
    %v559 = vmul.f32 %v535, 0.03125
    %v560 = vmul.f32 %v538, 0.03125
    %v561 = vmul.f32 %v543, 0.03125
    %v562 = vmul.f32 %v546, 0.03125
    %v563 = vmul.f32 %v551, 0.03125
    %v564 = vmul.f32 %v554, 0.03125
    %v565 = vmul.f32 %v557, 1.2
    %v566 = vmul.f32 %v558, 1.2
    %v567 = vmul.f32 %v559, 1.2
    %v568 = vmul.f32 %v560, 1.2
    %v569 = vmul.f32 %v561, 1.2
    %v570 = vmul.f32 %v562, 1.2
    %v571 = vmul.f32 %v563, 1.2
    %v572 = vmul.f32 %v564, 1.2
    %v573 = vsel %vm208, %v565, 0.0
    %v574 = vsel %vm208, %v566, 0.0
    %v575 = vsel %vm208, %v567, 0.0
    %v576 = vsel %vm208, %v568, 0.0
    %v577 = vsel %vm208, %v569, 0.0
    %v578 = vsel %vm208, %v570, 0.0
    %v579 = vsel %vm208, %v571, 0.0
    %v580 = vsel %vm208, %v572, 0.0
    %v581 = vadd.f32 %v395, %v573
    %v582 = vadd.f32 %v396, %v574
    %v583 = vadd.f32 %v397, %v575
    %v584 = vadd.f32 %v398, %v576
    %v585 = vadd.f32 %v399, %v577
    %v586 = vadd.f32 %v400, %v578
    %v587 = vadd.f32 %v401, %v579
    %v588 = vadd.f32 %v402, %v580
    %v589 = vsub.f32 %v557, %v573
    %v590 = vsub.f32 %v558, %v574
    %v591 = vsub.f32 %v559, %v575
    %v592 = vsub.f32 %v560, %v576
    %v593 = vsub.f32 %v561, %v577
    %v594 = vsub.f32 %v562, %v578
    %v595 = vsub.f32 %v563, %v579
    %v596 = vsub.f32 %v564, %v580
    %v597 = vpack.c.bf16 %v590, %v589
    %v598 = vpack.c.bf16 %v592, %v591
    %v599 = vpack.c.bf16 %v594, %v593
    %v600 = vpack.c.bf16 %v596, %v595
    %601 = vmatprep.subr.bf16.mxu0 0
    %602 = vmatpush1.bf16.msra.mxu0 %v124
    %603 = vmatprep.subr.bf16.mxu0 0
    %604 = vmatpush1.bf16.msra.mxu0 %v123
    %605 = vmatprep.subr.bf16.mxu0 0
    %606 = vmatpush1.bf16.msra.mxu0 %v122
    %607 = vmatprep.subr.bf16.mxu0 0
    %608 = vmatpush1.bf16.msra.mxu0 %v121
    %609 = vmatprep.subr.bf16.mxu0 0
    %610 = vmatpush1.bf16.msra.mxu0 %v120
    %611 = vmatprep.subr.bf16.mxu0 0
    %612 = vmatpush1.bf16.msra.mxu0 %v119
    %613 = vmatprep.subr.bf16.mxu0 0
    %614 = vmatpush1.bf16.msra.mxu0 %v118
    %615 = vmatprep.subr.bf16.mxu0 0
    %616 = vmatpush1.bf16.msra.mxu0 %v117
    %617 = vmatprep.subr.bf16.mxu0 0
    %618 = vmatpush2.bf16.msra.mxu0 0
    %619 = vmatprep.subr.bf16.mxu0 0
    %620 = vmatpush2.bf16.msra.mxu0 0
    %621 = vmatprep.subr.bf16.mxu0 0
    %622 = vmatpush2.bf16.msra.mxu0 0
    %623 = vmatprep.subr.bf16.mxu0 0
    %624 = vmatpush2.bf16.msra.mxu0 0
    %625 = vmatprep.subr.bf16.mxu0 0
    %626 = vmatpush2.bf16.msra.mxu0 0
    %627 = vmatprep.subr.bf16.mxu0 0
    %628 = vmatpush2.bf16.msra.mxu0 0
    %629 = vmatprep.subr.bf16.mxu0 0
    %630 = vmatpush2.bf16.msra.mxu0 0
    %631 = vmatprep.subr.bf16.mxu0 0
    %632 = vmatpush2.bf16.msra.mxu0 0
    %633 = vmatprep.mubr.bf16.mxu0 0
    %634 = vmatmul.mubr.bf16.gmra.mxu0 %v597
    %v635 = vpop.f32.mrf.mxu0
    %v636 = vadd.f32 0.0, %v635
    %v637 = vpop.f32.mrf.mxu0
    %v638 = vpop.f32.mrf.mxu0
    %v639 = vadd.f32 0.0, %v638
    %v640 = vpop.f32.mrf.mxu0
    %641 = vmatprep.mubr.bf16.mxu0 0
    %642 = vmatmul.mubr.bf16.gmra.mxu0 %v598
    %v643 = vpop.f32.mrf.mxu0
    %v644 = vadd.f32 0.0, %v643
    %v645 = vpop.f32.mrf.mxu0
    %v646 = vpop.f32.mrf.mxu0
    %v647 = vadd.f32 0.0, %v646
    %v648 = vpop.f32.mrf.mxu0
    %649 = vmatprep.mubr.bf16.mxu0 0
    %650 = vmatmul.mubr.bf16.gmra.mxu0 %v599
    %v651 = vpop.f32.mrf.mxu0
    %v652 = vadd.f32 0.0, %v651
    %v653 = vpop.f32.mrf.mxu0
    %v654 = vpop.f32.mrf.mxu0
    %v655 = vadd.f32 0.0, %v654
    %v656 = vpop.f32.mrf.mxu0
    %657 = vmatprep.mubr.bf16.mxu0 0
    %658 = vmatmul.mubr.bf16.gmra.mxu0 %v600
    %v659 = vpop.f32.mrf.mxu0
    %v660 = vadd.f32 0.0, %v659
    %v661 = vpop.f32.mrf.mxu0
    %v662 = vpop.f32.mrf.mxu0
    %v663 = vadd.f32 0.0, %v662
    %v664 = vpop.f32.mrf.mxu0
    %665 = vdwg.mxu0
    %v666 = vmax.f32 %v636, 0.0
    %v667 = vmax.f32 %v639, 0.0
    %v668 = vmax.f32 %v644, 0.0
    %v669 = vmax.f32 %v647, 0.0
    %v670 = vmax.f32 %v652, 0.0
    %v671 = vmax.f32 %v655, 0.0
    %v672 = vmax.f32 %v660, 0.0
    %v673 = vmax.f32 %v663, 0.0
    %v674 = vpack.c.bf16 %v667, %v666
    %v675 = vpack.c.bf16 %v669, %v668
    %v676 = vpack.c.bf16 %v671, %v670
    %v677 = vpack.c.bf16 %v673, %v672
    %678 = vmatprep.subr.bf16.mxu0 0
    %679 = vmatpush1.bf16.msra.mxu0 %v124
    %680 = vmatprep.subr.bf16.mxu0 0
    %681 = vmatpush1.bf16.msra.mxu0 %v123
    %682 = vmatprep.subr.bf16.mxu0 0
    %683 = vmatpush1.bf16.msra.mxu0 %v122
    %684 = vmatprep.subr.bf16.mxu0 0
    %685 = vmatpush1.bf16.msra.mxu0 %v121
    %686 = vmatprep.subr.bf16.mxu0 0
    %687 = vmatpush1.bf16.msra.mxu0 %v120
    %688 = vmatprep.subr.bf16.mxu0 0
    %689 = vmatpush1.bf16.msra.mxu0 %v119
    %690 = vmatprep.subr.bf16.mxu0 0
    %691 = vmatpush1.bf16.msra.mxu0 %v118
    %692 = vmatprep.subr.bf16.mxu0 0
    %693 = vmatpush1.bf16.msra.mxu0 %v117
    %694 = vmatprep.subr.bf16.mxu0 0
    %695 = vmatpush2.bf16.msra.mxu0 0
    %696 = vmatprep.subr.bf16.mxu0 0
    %697 = vmatpush2.bf16.msra.mxu0 0
    %698 = vmatprep.subr.bf16.mxu0 0
    %699 = vmatpush2.bf16.msra.mxu0 0
    %700 = vmatprep.subr.bf16.mxu0 0
    %701 = vmatpush2.bf16.msra.mxu0 0
    %702 = vmatprep.subr.bf16.mxu0 0
    %703 = vmatpush2.bf16.msra.mxu0 0
    %704 = vmatprep.subr.bf16.mxu0 0
    %705 = vmatpush2.bf16.msra.mxu0 0
    %706 = vmatprep.subr.bf16.mxu0 0
    %707 = vmatpush2.bf16.msra.mxu0 0
    %708 = vmatprep.subr.bf16.mxu0 0
    %709 = vmatpush2.bf16.msra.mxu0 0
    %710 = vmatprep.mubr.bf16.mxu0 0
    %711 = vmatmul.mubr.bf16.gmra.mxu0 %v674
    %v712 = vpop.f32.mrf.mxu0
    %v713 = vadd.f32 0.0, %v712
    %v714 = vpop.f32.mrf.mxu0
    %v715 = vpop.f32.mrf.mxu0
    %v716 = vadd.f32 0.0, %v715
    %v717 = vpop.f32.mrf.mxu0
    %718 = vmatprep.mubr.bf16.mxu0 0
    %719 = vmatmul.mubr.bf16.gmra.mxu0 %v675
    %v720 = vpop.f32.mrf.mxu0
    %v721 = vadd.f32 0.0, %v720
    %v722 = vpop.f32.mrf.mxu0
    %v723 = vpop.f32.mrf.mxu0
    %v724 = vadd.f32 0.0, %v723
    %v725 = vpop.f32.mrf.mxu0
    %726 = vmatprep.mubr.bf16.mxu0 0
    %727 = vmatmul.mubr.bf16.gmra.mxu0 %v676
    %v728 = vpop.f32.mrf.mxu0
    %v729 = vadd.f32 0.0, %v728
    %v730 = vpop.f32.mrf.mxu0
    %v731 = vpop.f32.mrf.mxu0
    %v732 = vadd.f32 0.0, %v731
    %v733 = vpop.f32.mrf.mxu0
    %734 = vmatprep.mubr.bf16.mxu0 0
    %735 = vmatmul.mubr.bf16.gmra.mxu0 %v677
    %v736 = vpop.f32.mrf.mxu0
    %v737 = vadd.f32 0.0, %v736
    %v738 = vpop.f32.mrf.mxu0
    %v739 = vpop.f32.mrf.mxu0
    %v740 = vadd.f32 0.0, %v739
    %v741 = vpop.f32.mrf.mxu0
    %742 = vdwg.mxu0
    %v743 = vmul.f32 %v713, 0.03125
    %v744 = vmul.f32 %v716, 0.03125
    %v745 = vmul.f32 %v721, 0.03125
    %v746 = vmul.f32 %v724, 0.03125
    %v747 = vmul.f32 %v729, 0.03125
    %v748 = vmul.f32 %v732, 0.03125
    %v749 = vmul.f32 %v737, 0.03125
    %v750 = vmul.f32 %v740, 0.03125
    %v751 = vmul.f32 %v743, 1.2
    %v752 = vmul.f32 %v744, 1.2
    %v753 = vmul.f32 %v745, 1.2
    %v754 = vmul.f32 %v746, 1.2
    %v755 = vmul.f32 %v747, 1.2
    %v756 = vmul.f32 %v748, 1.2
    %v757 = vmul.f32 %v749, 1.2
    %v758 = vmul.f32 %v750, 1.2
    %v759 = vsel %vm208, %v751, 0.0
    %v760 = vsel %vm208, %v752, 0.0
    %v761 = vsel %vm208, %v753, 0.0
    %v762 = vsel %vm208, %v754, 0.0
    %v763 = vsel %vm208, %v755, 0.0
    %v764 = vsel %vm208, %v756, 0.0
    %v765 = vsel %vm208, %v757, 0.0
    %v766 = vsel %vm208, %v758, 0.0
    %v767 = vadd.f32 %v581, %v759
    %v768 = vadd.f32 %v582, %v760
    %v769 = vadd.f32 %v583, %v761
    %v770 = vadd.f32 %v584, %v762
    %v771 = vadd.f32 %v585, %v763
    %v772 = vadd.f32 %v586, %v764
    %v773 = vadd.f32 %v587, %v765
    %v774 = vadd.f32 %v588, %v766
    %vm775 = vcmp.eq.s32.totalorder %v207, 0
    %v776 = vsel %vm775, 0.5, 1.0
    %v777 = vmul.f32 %v767, %v776
    %v778 = vmul.f32 %v768, %v776
    %v779 = vmul.f32 %v769, %v776
    %v780 = vmul.f32 %v770, %v776
    %v781 = vmul.f32 %v771, %v776
    %v782 = vmul.f32 %v772, %v776
    %v783 = vmul.f32 %v773, %v776
    %v784 = vmul.f32 %v774, %v776
    %785 = vst [vmem:[#allocation7] sm:$0xff] %v777
    %786 = vst [vmem:[#allocation7 + $0x8] sm:$0xff] %v778
    %787 = vst [vmem:[#allocation7 + $0x10] sm:$0xff] %v779
    %788 = vst [vmem:[#allocation7 + $0x18] sm:$0xff] %v780
    %789 = vst [vmem:[#allocation7 + $0x20] sm:$0xff] %v781
    %790 = vst [vmem:[#allocation7 + $0x28] sm:$0xff] %v782
    %791 = vst [vmem:[#allocation7 + $0x30] sm:$0xff] %v783
    %792 = vst [vmem:[#allocation7 + $0x38] sm:$0xff] %v784
    // Predicated region
    $region18: #{tpu_custom_call.1} parent=1 // pred_check
      _
    $region19: #{tpu_custom_call.1} parent=1 // pred_check_branch
      %794 = sbr.rel (0) target = $region21
    $region20: #{tpu_custom_call.1} parent=1 // pred_region
      %s796 = ssub.s32 1024, 1024
      %797 = vsyncadd [#allocation4], %s796
      %s798 = sshll.u32 [#allocation7], 4
      %s799 = int_to_ptr.vmem [resolvable:$true] %s798
      %804 = dma.vmem_to_hbm [thread:$0]  %s799, 1024, %s2, [#allocation4], 128, 128, 8
    $region21: #{tpu_custom_call.1} parent=1 // pred_fallthru
      _
    // Predicated region
    $region22: #{tpu_custom_call.1} parent=1 // pred_check
      _
    $region23: #{tpu_custom_call.1} parent=1 // pred_check_branch
      %806 = sbr.rel (0) target = $region25
    $region24: #{tpu_custom_call.1} parent=1 // pred_region
      %807 = dma.done [#allocation4], 1024
    $region25: #{tpu_custom_call.1} parent=1 // pred_fallthru
      _
    %808 = vsyncpa [#allocation3], 1
    %809 = vsyncpa [#allocation6], 1
    %810 = vsyncpa [#allocation4], 1

</llo_original>
